<compile_context>
chip_gen: v7x
topology: tpu7x:2x2x1
jax: 0.10.0
libtpu: 0.0.40
codegen_flags: <defaults>
</compile_context>

<pallas_src>
import functools

import jax
import jax.numpy as jnp
from jax.experimental import pallas as pl
from jax.experimental.pallas import tpu as pltpu


def _ffn1_kernel(*refs, hidden_dims, mm_dtype):
    """Fused MLP.

    refs = (x, W_0, ..., W_{H-1}, packed, out)
      x      : (rows, feature_dim)                       input rows
      W_i    : (fan_in_i, hidden_dims[i])                hidden-layer weights
      packed : (1, sum(hidden_dims) + hidden_dims[-1]+1) [b_0 | ... | w_last | b_last]
      out    : (1, rows)                                 lane-dense predictions
    """
    x_ref = refs[0]
    o_ref = refs[-1]
    packed = refs[-2][...]          # (1, P) f32, resident in VMEM
    w_refs = refs[1:-2]

    h = x_ref[...].astype(jnp.float32)
    off = 0
    for i, w_ref in enumerate(w_refs):
        width = hidden_dims[i]
        b = packed[:, off:off + width]                    # (1, width) f32
        off += width
        h = jnp.dot(h.astype(mm_dtype), w_ref[...].astype(mm_dtype),
                    preferred_element_type=jnp.float32) + b
        h = jnp.maximum(h, 0.0)     # ReLU; dropout is identity at inference

    f_last = hidden_dims[-1]
    w_last = packed[:, off:off + f_last]                  # (1, f_last)
    b_last = packed[:, off + f_last:off + f_last + 1]     # (1, 1)
    # Final Linear (f_last -> 1) computed lane-dense on the MXU:
    # (1, f_last) x (rows, f_last)^T -> (1, rows); avoids a (rows, 1) column
    # output and the masked / strided stores it would imply.
    y = jax.lax.dot_general(
        w_last.astype(mm_dtype), h.astype(mm_dtype),
        dimension_numbers=(((1,), (1,)), ((), ())),
        preferred_element_type=jnp.float32) + b_last
    o_ref[...] = y.astype(o_ref.dtype)


def init_ffn1_params(key, feature_dim, layer_sizes, dtype=jnp.float32):
    """Deterministic init mimicking nn.Linear (uniform +/- 1/sqrt(fan_in)).

    Returns list of (W, b) with W stored as (in, out)."""
    dims = [feature_dim] + list(layer_sizes) + [1]
    params = []
    for i in range(len(dims) - 1):
        fan_in, fan_out = dims[i], dims[i + 1]
        key, kw, kb = jax.random.split(key, 3)
        bound = 1.0 / float(fan_in) ** 0.5
        w = jax.random.uniform(kw, (fan_in, fan_out), dtype, -bound, bound)
        b = jax.random.uniform(kb, (fan_out,), dtype, -bound, bound)
        params.append((w, b))
    return params


def _pack_params(params, mm_dtype):
    """Hidden-layer weights (cast to matmul dtype) + one packed f32 row holding
    all biases, the final layer's weight row and its bias."""
    weights = [w.astype(mm_dtype) for w, _ in params[:-1]]
    pieces = [b.reshape(1, -1).astype(jnp.float32) for _, b in params[:-1]]
    w_last, b_last = params[-1]
    pieces.append(w_last.reshape(1, -1).astype(jnp.float32))   # (1, f_last)
    pieces.append(b_last.reshape(1, 1).astype(jnp.float32))    # (1, 1)
    packed = jnp.concatenate(pieces, axis=1)
    return weights, packed


def _round_down(x, m):
    return (x // m) * m


def ffn1_forward(params, x, *, row_tile=8192, use_bf16=True,
                 vmem_resident_max_rows=2048):
    """FFN_1 forward. x: (N, feature_dim) -> (N,)."""
    n, f_in = x.shape
    hidden_dims = tuple(w.shape[1] for w, _ in params[:-1])
    mm_dtype = jnp.bfloat16 if use_bf16 else jnp.float32
    weights, packed = _pack_params(params, mm_dtype)
    kernel = functools.partial(_ffn1_kernel, hidden_dims=hidden_dims,
                               mm_dtype=mm_dtype)
    n_inputs = 1 + len(weights) + 1
    out_dtype = x.dtype

    if n <= vmem_resident_max_rows:
        # Genuinely small batch: x, weights and out all VMEM-resident, no grid.
        vmem = pl.BlockSpec(memory_space=pltpu.MemorySpace.VMEM)
        out = pl.pallas_call(
            kernel,
            out_shape=jax.ShapeDtypeStruct((1, n), out_dtype),
            in_specs=[vmem] * n_inputs,
            out_specs=vmem,
        )(x, *weights, packed)
        return out.reshape(-1)

    # Streaming path: big row tiles, capped at ~n//4 so the parallel grid axis
    # has >=2 steps per TensorCore on v7x; last tile zero-padded.
    cap = max(256, _round_down(n // 4, 256))
    rt = min(max(256, _round_down(int(row_tile), 256)), cap)
    num_tiles = pl.cdiv(n, rt)
    n_pad = num_tiles * rt
    if n_pad != n:
        x = jnp.pad(x, ((0, n_pad - n), (0, 0)))

    # TODO(synk): on v5e, storing x as bf16 in HBM would halve the dominant
    # read traffic; kept f32 here to preserve the module's f32 interface.
    weight_specs = [pl.BlockSpec(w.shape, lambda i: (0, 0)) for w in weights]
    packed_spec = pl.BlockSpec(packed.shape, lambda i: (0, 0))
    out = pl.pallas_call(
        kernel,
        out_shape=jax.ShapeDtypeStruct((num_tiles, rt), out_dtype),
        grid=(num_tiles,),
        in_specs=[pl.BlockSpec((rt, f_in), lambda i: (i, 0))]
                 + weight_specs + [packed_spec],
        out_specs=pl.BlockSpec((1, rt), lambda i: (i, 0)),
        compiler_params=pltpu.CompilerParams(
            dimension_semantics=("parallel",)),
    )(x, *weights, packed)
    return out.reshape(-1)[:n]


def _ref_forward(params, x):
    h = x
    for w, b in params[:-1]:
        h = jnp.maximum(
            jnp.dot(h, w, precision=jax.lax.Precision.HIGHEST) + b, 0.0)
    w_last, b_last = params[-1]
    y = jnp.dot(h, w_last, precision=jax.lax.Precision.HIGHEST) + b_last
    return y.reshape(-1)


if __name__ == "__main__":
    key = jax.random.PRNGKey(0)
    k_param, k_x1, k_x2 = jax.random.split(key, 3)

    # model_params equivalent: feature_dim=32, layer_sizes=[64, 32], dropout=0.0
    feature_dim = 32
    layer_sizes = [64, 32]
    params = init_ffn1_params(k_param, feature_dim, layer_sizes)

    # 1) Small batch -> fully VMEM-resident no-grid path, f32 matmuls.
    x_small = jax.random.normal(k_x1, (16, feature_dim), jnp.float32)
    out_small = ffn1_forward(params, x_small, use_bf16=False)
    jax.block_until_ready(out_small)
    assert out_small.shape == (16,)
    assert jnp.allclose(out_small, _ref_forward(params, x_small),
                        atol=1e-3, rtol=1e-3)

    # 2) Streaming grid path: non-multiple batch exercises padding, pinned
    #    weights, lane-dense output block and bf16 matmul inputs.
    x_big = jax.random.normal(k_x2, (1000, feature_dim), jnp.float32)
    out_big = ffn1_forward(params, x_big, row_tile=256,
                           vmem_resident_max_rows=0)
    jax.block_until_ready(out_big)
    assert out_big.shape == (1000,)
    assert jnp.allclose(out_big, _ref_forward(params, x_big),
                        atol=3e-2, rtol=3e-2)

    print("KERNEL_OK")
</pallas_src>

<mosaic_0001>
module attributes {stable_mosaic.version = 11 : i64} {
  func.func @_ffn1_kernel(%arg0: memref<16x32xf32, #tpu.memory_space<vmem>>, %arg1: memref<32x64xf32, #tpu.memory_space<vmem>>, %arg2: memref<64x32xf32, #tpu.memory_space<vmem>>, %arg3: memref<1x129xf32, #tpu.memory_space<vmem>>, %arg4: memref<1x16xf32, #tpu.memory_space<vmem>>) attributes {dimension_semantics = [], scalar_prefetch = 0 : i64, scratch_operands = 0 : i64, tpu.core_type = #tpu.core_type<tc>} {
    %c0 = arith.constant 0 : index
    %c0_0 = arith.constant 0 : index
    %0 = vector.load %arg3[%c0, %c0_0] : memref<1x129xf32, #tpu.memory_space<vmem>>, vector<1x129xf32>
    %c0_1 = arith.constant 0 : index
    %c0_2 = arith.constant 0 : index
    %1 = vector.load %arg0[%c0_1, %c0_2] : memref<16x32xf32, #tpu.memory_space<vmem>>, vector<16x32xf32>
    %2 = vector.extract_strided_slice %0 {offsets = [0, 0], sizes = [1, 64], strides = [1, 1]} : vector<1x129xf32> to vector<1x64xf32>
    %c0_3 = arith.constant 0 : index
    %c0_4 = arith.constant 0 : index
    %3 = vector.load %arg1[%c0_3, %c0_4] : memref<32x64xf32, #tpu.memory_space<vmem>>, vector<32x64xf32>
    %cst = arith.constant dense<0.000000e+00> : vector<16x64xf32>
    %4 = tpu.matmul %1, %3, %cst {dimension_numbers = #tpu.dot_dimension_numbers<[1], [0], [0], [1], [0, 0, 1, 1], [], []>} : vector<16x32xf32>, vector<32x64xf32>, vector<16x64xf32> -> vector<16x64xf32>
    %5 = vector.broadcast %2 : vector<1x64xf32> to vector<16x64xf32>
    %6 = arith.addf %4, %5 : vector<16x64xf32>
    %cst_5 = arith.constant 0.000000e+00 : f32
    %7 = vector.broadcast %cst_5 : f32 to vector<16x64xf32>
    %8 = arith.maximumf %6, %7 : vector<16x64xf32>
    %9 = vector.extract_strided_slice %0 {offsets = [0, 64], sizes = [1, 32], strides = [1, 1]} : vector<1x129xf32> to vector<1x32xf32>
    %c0_6 = arith.constant 0 : index
    %c0_7 = arith.constant 0 : index
    %10 = vector.load %arg2[%c0_6, %c0_7] : memref<64x32xf32, #tpu.memory_space<vmem>>, vector<64x32xf32>
    %cst_8 = arith.constant dense<0.000000e+00> : vector<16x32xf32>
    %11 = tpu.matmul %8, %10, %cst_8 {dimension_numbers = #tpu.dot_dimension_numbers<[1], [0], [0], [1], [0, 0, 1, 1], [], []>} : vector<16x64xf32>, vector<64x32xf32>, vector<16x32xf32> -> vector<16x32xf32>
    %12 = vector.broadcast %9 : vector<1x32xf32> to vector<16x32xf32>
    %13 = arith.addf %11, %12 : vector<16x32xf32>
    %cst_9 = arith.constant 0.000000e+00 : f32
    %14 = vector.broadcast %cst_9 : f32 to vector<16x32xf32>
    %15 = arith.maximumf %13, %14 : vector<16x32xf32>
    %16 = vector.extract_strided_slice %0 {offsets = [0, 96], sizes = [1, 32], strides = [1, 1]} : vector<1x129xf32> to vector<1x32xf32>
    %17 = vector.extract_strided_slice %0 {offsets = [0, 128], sizes = [1, 1], strides = [1, 1]} : vector<1x129xf32> to vector<1x1xf32>
    %cst_10 = arith.constant dense<0.000000e+00> : vector<1x16xf32>
    %18 = tpu.matmul %16, %15, %cst_10 {dimension_numbers = #tpu.dot_dimension_numbers<[1], [1], [0], [0], [0, 0, 1, 0], [], []>} : vector<1x32xf32>, vector<16x32xf32>, vector<1x16xf32> -> vector<1x16xf32>
    %19 = vector.broadcast %17 : vector<1x1xf32> to vector<1x16xf32>
    %20 = arith.addf %18, %19 : vector<1x16xf32>
    %c0_11 = arith.constant 0 : index
    %c0_12 = arith.constant 0 : index
    %21 = vector.load %arg4[%c0_11, %c0_12] : memref<1x16xf32, #tpu.memory_space<vmem>>, vector<1x16xf32>
    tpu.vector_store %arg4[%c0_11, %c0_12], %20 {strides = array<i32>} : memref<1x16xf32, #tpu.memory_space<vmem>>, vector<1x16xf32>,
    return
  }
}

</mosaic_0001>

<llo_original>
// kernel: tpu_custom_call.1
$region0: #{tpu_custom_call.1}
  #allocation0 [shape = 'u32[]', space=smem, size = 0x4, offset = 0x4, fixed_abs, tag = 'smem constant byte address 0x4 - core index']
  #allocation1 [shape = 'u32[144,128]{1,0:T(1,128)}', space=vmem, size = 0x12000, scoped, tag = 'internal scratch']
  %s0 = inlined_call_operand.vmem [shape: f32[16,32], index: 0, kind: input, shape index: {}]
  %s1 = inlined_call_operand.vmem [shape: f32[32,64], index: 1, kind: input, shape index: {}]
  %s2 = inlined_call_operand.vmem [shape: f32[64,32], index: 2, kind: input, shape index: {}]
  %s3 = inlined_call_operand.vmem [shape: f32[1,129], index: 3, kind: input, shape index: {}]
  %s4 = inlined_call_operand.hbm [shape: f32[1,16], index: 4, kind: output, shape index: {}]
  %s5 = sld [smem:[#allocation0]]
  $region26: #{tpu_custom_call.1} parent=0
    _
  %s7 = ssub.s32 1, %s5
  %s8 = scalar_select 0, %s7, %s5
  $region1: #{tpu_custom_call.1} parent=0
    #allocation2 [shape = 'u8[512]{0}', space=vmem, size = 0x400, scoped, tag = 'output window, operand 0, single buffered']
    #allocation3 [shape = 's32[1]{0}', space=sflag, size = 0x4, scoped, tag = 'scoped memory for tpu_custom_call.1']
    %9 = vsyncpa [#allocation3], 0
    // Predicated region
    $region2: #{tpu_custom_call.1} parent=1 // pred_check
      _
    $region3: #{tpu_custom_call.1} parent=1 // pred_check_branch
      %11 = sbr.rel (0) target = $region5
    $region4: #{tpu_custom_call.1} parent=1 // pred_region
      _
    $region5: #{tpu_custom_call.1} parent=1 // pred_fallthru
      _
    // Predicated region
    $region6: #{tpu_custom_call.1} parent=1 // pred_check
      _
    $region7: #{tpu_custom_call.1} parent=1 // pred_check_branch
      %13 = sbr.rel (0) target = $region9
    $region8: #{tpu_custom_call.1} parent=1 // pred_region
      _
    $region9: #{tpu_custom_call.1} parent=1 // pred_fallthru
      _
    // Predicated region
    $region10: #{tpu_custom_call.1} parent=1 // pred_check
      _
    $region11: #{tpu_custom_call.1} parent=1 // pred_check_branch
      %15 = sbr.rel (0) target = $region13
    $region12: #{tpu_custom_call.1} parent=1 // pred_region
      _
    $region13: #{tpu_custom_call.1} parent=1 // pred_fallthru
      _
    // Predicated region
    $region14: #{tpu_custom_call.1} parent=1 // pred_check
      _
    $region15: #{tpu_custom_call.1} parent=1 // pred_check_branch
      %17 = sbr.rel (0) target = $region17
    $region16: #{tpu_custom_call.1} parent=1 // pred_region
      _
    $region17: #{tpu_custom_call.1} parent=1 // pred_fallthru
      _
    %v18 = vld [vmem:[%s3] sm:$0x3]
    %v19 = vld [vmem:[%s0] sm:$0xff]
    %v20 = vld [vmem:[%s0 + $0x8] sm:$0xff]
    %v21 = vld [vmem:[%s1] sm:$0xff]
    %v22 = vld [vmem:[%s1 + $0x8] sm:$0xff]
    %v23 = vld [vmem:[%s1 + $0x10] sm:$0xff]
    %v24 = vld [vmem:[%s1 + $0x18] sm:$0xff]
    %v26 = vlaneseq
    %v27 = vshrl.u32 %v26, 7
    %v28 = vsub.s32 0, %v27
    %v29 = vrot.slane %v18, %v28
    %vm31 = vcmask 261120
    %v33 = vsel %vm31, %v19, 0
    %v36 = vsel %vm31, %v20, 0
    %38 = vmatprep.subr.mxu0 0.0
    %39 = vmatpush1.msra.mxu0 %v21
    %40 = vmatprep.subr.mxu0 0.0
    %41 = vmatpush1.msra.mxu0 %v22
    %42 = vmatprep.subr.mxu0 0.0
    %43 = vmatpush1.msra.mxu0 %v23
    %44 = vmatprep.subr.mxu0 0.0
    %45 = vmatpush1.msra.mxu0 %v24
    %46 = vmatprep.subr.mxu0 0.0
    %47 = vmatpush1.msra.mxu0 0.0
    %48 = vmatprep.subr.mxu0 0.0
    %49 = vmatpush1.msra.mxu0 0.0
    %50 = vmatprep.subr.mxu0 0.0
    %51 = vmatpush1.msra.mxu0 0.0
    %52 = vmatprep.subr.mxu0 0.0
    %53 = vmatpush1.msra.mxu0 0.0
    %54 = vmatprep.subr.mxu0 0.0
    %55 = vmatpush1.msra.mxu0 0.0
    %56 = vmatprep.subr.mxu0 0.0
    %57 = vmatpush1.msra.mxu0 0.0
    %58 = vmatprep.subr.mxu0 0.0
    %59 = vmatpush1.msra.mxu0 0.0
    %60 = vmatprep.subr.mxu0 0.0
    %61 = vmatpush1.msra.mxu0 0.0
    %62 = vmatprep.subr.mxu0 0.0
    %63 = vmatpush1.msra.mxu0 0.0
    %64 = vmatprep.subr.mxu0 0.0
    %65 = vmatpush1.msra.mxu0 0.0
    %66 = vmatprep.subr.mxu0 0.0
    %67 = vmatpush1.msra.mxu0 0.0
    %68 = vmatprep.subr.mxu0 0.0
    %69 = vmatpush1.msra.mxu0 0.0
    %70 = vmatprep.subr.mxu0 0.0
    %71 = vmatpush1.msra.mxu0 0.0
    %72 = vmatprep.subr.mxu0 0.0
    %73 = vmatpush1.msra.mxu0 0.0
    %74 = vmatprep.subr.mxu0 0.0
    %75 = vmatpush1.msra.mxu0 0.0
    %76 = vmatprep.subr.mxu0 0.0
    %77 = vmatpush1.msra.mxu0 0.0
    %78 = vmatprep.subr.mxu0 0.0
    %79 = vmatpush1.msra.mxu0 0.0
    %80 = vmatprep.subr.mxu0 0.0
    %81 = vmatpush1.msra.mxu0 0.0
    %82 = vmatprep.subr.mxu0 0.0
    %83 = vmatpush1.msra.mxu0 0.0
    %84 = vmatprep.subr.mxu0 0.0
    %85 = vmatpush1.msra.mxu0 0.0
    %86 = vmatprep.subr.mxu0 0.0
    %87 = vmatpush1.msra.mxu0 0.0
    %88 = vmatprep.subr.mxu0 0.0
    %89 = vmatpush1.msra.mxu0 0.0
    %90 = vmatprep.subr.mxu0 0.0
    %91 = vmatpush1.msra.mxu0 0.0
    %92 = vmatprep.subr.mxu0 0.0
    %93 = vmatpush1.msra.mxu0 0.0
    %94 = vmatprep.subr.mxu0 0.0
    %95 = vmatpush1.msra.mxu0 0.0
    %96 = vmatprep.subr.mxu0 0.0
    %97 = vmatpush1.msra.mxu0 0.0
    %98 = vmatprep.subr.mxu0 0.0
    %99 = vmatpush1.msra.mxu0 0.0
    %100 = vmatprep.subr.mxu0 0.0
    %101 = vmatpush1.msra.mxu0 0.0
    %102 = vmatprep.mubr.f32.mxu0 0.0
    %103 = vmatmul.mubr.f32.gmra.mrb[0].mxu0 %v33
    %v104 = vpop.f32.mrb[0].mxu0
    %v105 = vadd.f32 %v29, %v104
    %v106 = vpop.f32.mrb[0].mxu0
    %107 = vmatprep.mubr.f32.mxu0 0.0
    %108 = vmatmul.mubr.f32.gmra.mrb[0].mxu0 %v36
    %v109 = vpop.f32.mrb[0].mxu0
    %v110 = vadd.f32 %v29, %v109
    %v111 = vpop.f32.mrb[0].mxu0
    %112 = vdwg.mxu0
    %v113 = vmax.f32 %v105, 0.0
    %v114 = vmax.f32 %v110, 0.0
    %v115 = vld [vmem:[%s2] sm:$0xff]
    %v116 = vld [vmem:[%s2 + $0x8] sm:$0xff]
    %v117 = vld [vmem:[%s2 + $0x10] sm:$0xff]
    %v118 = vld [vmem:[%s2 + $0x18] sm:$0xff]
    %v119 = vld [vmem:[%s2 + $0x20] sm:$0xff]
    %v120 = vld [vmem:[%s2 + $0x28] sm:$0xff]
    %v121 = vld [vmem:[%s2 + $0x30] sm:$0xff]
    %v122 = vld [vmem:[%s2 + $0x38] sm:$0xff]
    %123 = vrot.lane.b32.xlu0 %v29, 64
    %v124 = vpop.permute.xlu0 %123
    %vm126 = vcmask 523264
    %v128 = vsel %vm126, %v113, 0
    %v131 = vsel %vm126, %v114, 0
    %133 = vmatprep.subr.mxu0 0.0
    %134 = vmatpush1.msra.mxu0 %v115
    %135 = vmatprep.subr.mxu0 0.0
    %136 = vmatpush1.msra.mxu0 %v116
    %137 = vmatprep.subr.mxu0 0.0
    %138 = vmatpush1.msra.mxu0 %v117
    %139 = vmatprep.subr.mxu0 0.0
    %140 = vmatpush1.msra.mxu0 %v118
    %141 = vmatprep.subr.mxu0 0.0
    %142 = vmatpush1.msra.mxu0 %v119
    %143 = vmatprep.subr.mxu0 0.0
    %144 = vmatpush1.msra.mxu0 %v120
    %145 = vmatprep.subr.mxu0 0.0
    %146 = vmatpush1.msra.mxu0 %v121
    %147 = vmatprep.subr.mxu0 0.0
    %148 = vmatpush1.msra.mxu0 %v122
    %149 = vmatprep.subr.mxu0 0.0
    %150 = vmatpush1.msra.mxu0 0.0
    %151 = vmatprep.subr.mxu0 0.0
    %152 = vmatpush1.msra.mxu0 0.0
    %153 = vmatprep.subr.mxu0 0.0
    %154 = vmatpush1.msra.mxu0 0.0
    %155 = vmatprep.subr.mxu0 0.0
    %156 = vmatpush1.msra.mxu0 0.0
    %157 = vmatprep.subr.mxu0 0.0
    %158 = vmatpush1.msra.mxu0 0.0
    %159 = vmatprep.subr.mxu0 0.0
    %160 = vmatpush1.msra.mxu0 0.0
    %161 = vmatprep.subr.mxu0 0.0
    %162 = vmatpush1.msra.mxu0 0.0
    %163 = vmatprep.subr.mxu0 0.0
    %164 = vmatpush1.msra.mxu0 0.0
    %165 = vmatprep.subr.mxu0 0.0
    %166 = vmatpush1.msra.mxu0 0.0
    %167 = vmatprep.subr.mxu0 0.0
    %168 = vmatpush1.msra.mxu0 0.0
    %169 = vmatprep.subr.mxu0 0.0
    %170 = vmatpush1.msra.mxu0 0.0
    %171 = vmatprep.subr.mxu0 0.0
    %172 = vmatpush1.msra.mxu0 0.0
    %173 = vmatprep.subr.mxu0 0.0
    %174 = vmatpush1.msra.mxu0 0.0
    %175 = vmatprep.subr.mxu0 0.0
    %176 = vmatpush1.msra.mxu0 0.0
    %177 = vmatprep.subr.mxu0 0.0
    %178 = vmatpush1.msra.mxu0 0.0
    %179 = vmatprep.subr.mxu0 0.0
    %180 = vmatpush1.msra.mxu0 0.0
    %181 = vmatprep.subr.mxu0 0.0
    %182 = vmatpush1.msra.mxu0 0.0
    %183 = vmatprep.subr.mxu0 0.0
    %184 = vmatpush1.msra.mxu0 0.0
    %185 = vmatprep.subr.mxu0 0.0
    %186 = vmatpush1.msra.mxu0 0.0
    %187 = vmatprep.subr.mxu0 0.0
    %188 = vmatpush1.msra.mxu0 0.0
    %189 = vmatprep.subr.mxu0 0.0
    %190 = vmatpush1.msra.mxu0 0.0
    %191 = vmatprep.subr.mxu0 0.0
    %192 = vmatpush1.msra.mxu0 0.0
    %193 = vmatprep.subr.mxu0 0.0
    %194 = vmatpush1.msra.mxu0 0.0
    %195 = vmatprep.subr.mxu0 0.0
    %196 = vmatpush1.msra.mxu0 0.0
    %197 = vmatprep.mubr.f32.mxu0 0.0
    %198 = vmatmul.mubr.f32.gmra.mrb[0].mxu0 %v128
    %v199 = vpop.f32.mrb[0].mxu0
    %v200 = vadd.f32 %v124, %v199
    %v201 = vpop.f32.mrb[0].mxu0
    %202 = vmatprep.mubr.f32.mxu0 0.0
    %203 = vmatmul.mubr.f32.gmra.mrb[0].mxu0 %v131
    %v204 = vpop.f32.mrb[0].mxu0
    %v205 = vadd.f32 %v124, %v204
    %v206 = vpop.f32.mrb[0].mxu0
    %207 = vdwg.mxu0
    %v208 = vmax.f32 %v200, 0.0
    %v209 = vmax.f32 %v205, 0.0
    %210 = vset.pattern.permute.xlu0 0
    %211 = vperm.xlu0 %210, %v18
    %v212 = vpop.permute.xlu0 %211
    %v214 = vlaneseq
    %v215 = vshrl.u32 %v214, 7
    %v216 = vsub.s32 1, %v215
    %v217 = vrot.slane %v212, %v216
    %218 = vrot.lane.b32.xlu0 %v29, 32
    %v219 = vpop.permute.xlu0 %218
    %v220 = vsel %vm31, %v219, 0
    %v223 = vsel %vm31, %v208, 0
    %v226 = vsel %vm31, %v209, 0
    %228 = vmatprep.subr.mxu0 0.0
    %229 = vmatpush1.xpose.msra.mxu0 %v223
    %230 = vmatprep.subr.mxu0 0.0
    %231 = vmatpush1.xpose.msra.mxu0 %v226
    %232 = vmatprep.subr.mxu0 0.0
    %233 = vmatpush1.xpose.msra.mxu0 0.0
    %234 = vmatprep.subr.mxu0 0.0
    %235 = vmatpush1.xpose.msra.mxu0 0.0
    %236 = vmatprep.subr.mxu0 0.0
    %237 = vmatpush1.xpose.msra.mxu0 0.0
    %238 = vmatprep.subr.mxu0 0.0
    %239 = vmatpush1.xpose.msra.mxu0 0.0
    %240 = vmatprep.subr.mxu0 0.0
    %241 = vmatpush1.xpose.msra.mxu0 0.0
    %242 = vmatprep.subr.mxu0 0.0
    %243 = vmatpush1.xpose.msra.mxu0 0.0
    %244 = vmatprep.subr.mxu0 0.0
    %245 = vmatpush1.xpose.msra.mxu0 0.0
    %246 = vmatprep.subr.mxu0 0.0
    %247 = vmatpush1.xpose.msra.mxu0 0.0
    %248 = vmatprep.subr.mxu0 0.0
    %249 = vmatpush1.xpose.msra.mxu0 0.0
    %250 = vmatprep.subr.mxu0 0.0
    %251 = vmatpush1.xpose.msra.mxu0 0.0
    %252 = vmatprep.subr.mxu0 0.0
    %253 = vmatpush1.xpose.msra.mxu0 0.0
    %254 = vmatprep.subr.mxu0 0.0
    %255 = vmatpush1.xpose.msra.mxu0 0.0
    %256 = vmatprep.subr.mxu0 0.0
    %257 = vmatpush1.xpose.msra.mxu0 0.0
    %258 = vmatprep.subr.mxu0 0.0
    %259 = vmatpush1.xpose.msra.mxu0 0.0
    %260 = vmatprep.subr.mxu0 0.0
    %261 = vmatpush1.xpose.msra.mxu0 0.0
    %262 = vmatprep.subr.mxu0 0.0
    %263 = vmatpush1.xpose.msra.mxu0 0.0
    %264 = vmatprep.subr.mxu0 0.0
    %265 = vmatpush1.xpose.msra.mxu0 0.0
    %266 = vmatprep.subr.mxu0 0.0
    %267 = vmatpush1.xpose.msra.mxu0 0.0
    %268 = vmatprep.subr.mxu0 0.0
    %269 = vmatpush1.xpose.msra.mxu0 0.0
    %270 = vmatprep.subr.mxu0 0.0
    %271 = vmatpush1.xpose.msra.mxu0 0.0
    %272 = vmatprep.subr.mxu0 0.0
    %273 = vmatpush1.xpose.msra.mxu0 0.0
    %274 = vmatprep.subr.mxu0 0.0
    %275 = vmatpush1.xpose.msra.mxu0 0.0
    %276 = vmatprep.subr.mxu0 0.0
    %277 = vmatpush1.xpose.msra.mxu0 0.0
    %278 = vmatprep.subr.mxu0 0.0
    %279 = vmatpush1.xpose.msra.mxu0 0.0
    %280 = vmatprep.subr.mxu0 0.0
    %281 = vmatpush1.xpose.msra.mxu0 0.0
    %282 = vmatprep.subr.mxu0 0.0
    %283 = vmatpush1.xpose.msra.mxu0 0.0
    %284 = vmatprep.subr.mxu0 0.0
    %285 = vmatpush1.xpose.msra.mxu0 0.0
    %286 = vmatprep.subr.mxu0 0.0
    %287 = vmatpush1.xpose.msra.mxu0 0.0
    %288 = vmatprep.subr.mxu0 0.0
    %289 = vmatpush1.xpose.msra.mxu0 0.0
    %290 = vmatprep.subr.mxu0 0.0
    %291 = vmatpush1.xpose.msra.mxu0 0.0
    %292 = vmatprep.mubr.f32.mxu0 0.0
    %293 = vmatmul.mubr.f32.gmra.mrb[0].mxu0 %v220
    %v294 = vpop.f32.mrb[0].mxu0
    %v295 = vadd.f32 %v217, %v294
    %v296 = vpop.f32.mrb[0].mxu0
    %297 = vdwg.mxu0
    %vm298 = vcmask 122880
    %299 = vst.msk [vmem:[#allocation2] sm:$0x1] %vm298, %v295
    // Predicated region
    $region18: #{tpu_custom_call.1} parent=1 // pred_check
      _
    $region19: #{tpu_custom_call.1} parent=1 // pred_check_branch
      %301 = sbr.rel (0) target = $region21
    $region20: #{tpu_custom_call.1} parent=1 // pred_region
      %s303 = ssub.s32 16, 16
      %304 = vsyncadd [#allocation3], %s303
      %s306 = sshll.u32 [#allocation2], 4
      %s307 = int_to_ptr.vmem [resolvable:$true] %s306
      %309 = dma.vmem_to_hbm [thread:$0]  %s307, 16, %s4, [#allocation3]
    $region21: #{tpu_custom_call.1} parent=1 // pred_fallthru
      _
    // Predicated region
    $region22: #{tpu_custom_call.1} parent=1 // pred_check
      _
    $region23: #{tpu_custom_call.1} parent=1 // pred_check_branch
      %311 = sbr.rel (0) target = $region25
    $region24: #{tpu_custom_call.1} parent=1 // pred_region
      %312 = dma.done [#allocation3], 16
    $region25: #{tpu_custom_call.1} parent=1 // pred_fallthru
      _
    %313 = vsyncpa [#allocation3], 1

</llo_original>
